<compile_context>
chip_gen: v5e
topology: v5e:2x2
jax: 0.10.0
libtpu: 0.0.40
codegen_flags: <defaults>
</compile_context>

<pallas_src>
import functools

import jax
import jax.numpy as jnp
from jax.experimental import pallas as pl
from jax.experimental.pallas import tpu as pltpu

D_IN, D_HID, D_OUT = 2, 50, 10


def _round_up(n, m):
    return (n + m - 1) // m * m


def mlp_kernel(x_ref, w1_ref, b1_ref, w2_ref, b2_ref, o_ref):
    # x_ref: (2, TB)   w1_ref: (50, 2)   b1_ref: (50, 1)
    # w2_ref: (10, 50) b2_ref: (10, 1)   o_ref: (10, TB)
    x = x_ref[...]
    w1 = w1_ref[...]
    # ---- Layer 1 on the VPU: two broadcast FMAs over the K=2 contraction ----
    h = w1[:, 0:1] * x[0:1, :] + w1[:, 1:2] * x[1:2, :] + b1_ref[...]  # (50, TB)
    h = jnp.maximum(h, 0.0)                                            # ReLU
    # ---- Layer 2 on the MXU: batch (TB) sits on the N dimension ----
    y = jnp.dot(
        w2_ref[...], h,
        preferred_element_type=jnp.float32,
        precision=jax.lax.Precision.HIGHEST,
    )
    o_ref[...] = (y + b2_ref[...]).astype(o_ref.dtype)


@functools.partial(jax.jit, static_argnames=("tb",))
def pool_encoder_forward(x, w1, b1, w2, b2, *, tb=2048):
    """x: (B, 2) float32 -> (B, 10) float32.

    w1: (50, 2), b1: (50, 1), w2: (10, 50), b2: (10, 1) (PyTorch-native layout).
    """
    B = x.shape[0]
    # Lane-dense batch tile: multiple of 128, capped at `tb` so the (50, TB) f32
    # intermediate stays small (fits v5e's 16 MiB scoped VMEM and v7x's 64 MiB).
    TB = min(tb, _round_up(max(B, 1), 128))
    Bp = _round_up(B, TB)

    # Transpose + zero-pad batch out to a multiple of TB (padded columns are
    # garbage after the bias-add and sliced away below).
    x_t = jnp.pad(x.astype(jnp.float32).T, ((0, 0), (0, Bp - B)))  # (2, Bp)

    out_t = pl.pallas_call(
        mlp_kernel,
        out_shape=jax.ShapeDtypeStruct((D_OUT, Bp), jnp.float32),
        grid_spec=pltpu.PrefetchScalarGridSpec(
            num_scalar_prefetch=0,
            grid=(Bp // TB,),
            in_specs=[
                pl.BlockSpec((D_IN, TB), lambda i: (0, i)),      # x tile (streamed)
                pl.BlockSpec((D_HID, D_IN), lambda i: (0, 0)),   # w1 (resident)
                pl.BlockSpec((D_HID, 1), lambda i: (0, 0)),      # b1 (resident)
                pl.BlockSpec((D_OUT, D_HID), lambda i: (0, 0)),  # w2 (resident)
                pl.BlockSpec((D_OUT, 1), lambda i: (0, 0)),      # b2 (resident)
            ],
            out_specs=pl.BlockSpec((D_OUT, TB), lambda i: (0, i)),
        ),
        compiler_params=pltpu.CompilerParams(
            dimension_semantics=("parallel",),       # shards batch across TCs on v7x
            vmem_limit_bytes=32 * 1024 * 1024,
        ),
    )(x_t, w1, b1, w2, b2)

    return out_t[:, :B].T                            # back to (B, 10)


def init_params(key):
    """PyTorch nn.Linear default init: U(-1/sqrt(fan_in), 1/sqrt(fan_in))."""
    k1, k2, k3, k4 = jax.random.split(key, 4)
    bound1 = 1.0 / jnp.sqrt(jnp.float32(D_IN))
    w1 = jax.random.uniform(k1, (D_HID, D_IN), jnp.float32, -bound1, bound1)
    b1 = jax.random.uniform(k2, (D_HID, 1), jnp.float32, -bound1, bound1)
    bound2 = 1.0 / jnp.sqrt(jnp.float32(D_HID))
    w2 = jax.random.uniform(k3, (D_OUT, D_HID), jnp.float32, -bound2, bound2)
    b2 = jax.random.uniform(k4, (D_OUT, 1), jnp.float32, -bound2, bound2)
    return w1, b1, w2, b2


def reference_forward(x, w1, b1, w2, b2):
    h = jnp.maximum(
        jnp.dot(x, w1.T, precision=jax.lax.Precision.HIGHEST) + b1.T, 0.0)
    return jnp.dot(h, w2.T, precision=jax.lax.Precision.HIGHEST) + b2.T


if __name__ == "__main__":
    key = jax.random.PRNGKey(0)
    k_params, k_x1, k_x2 = jax.random.split(key, 3)
    w1, b1, w2, b2 = init_params(k_params)

    # Small case matching the module's typical use (B=8, 2 features).
    B = 8
    x = jax.random.normal(k_x1, (B, 2), jnp.float32)
    out = jax.block_until_ready(pool_encoder_forward(x, w1, b1, w2, b2))
    ref = reference_forward(x, w1, b1, w2, b2)
    assert out.shape == (B, 10)
    assert jnp.allclose(out, ref, atol=1e-4, rtol=1e-4), "mismatch vs reference (B=8)"

    # Larger, non-aligned batch to exercise the tiled grid + padding path.
    B2 = 4100
    x2 = jax.random.normal(k_x2, (B2, 2), jnp.float32)
    out2 = jax.block_until_ready(pool_encoder_forward(x2, w1, b1, w2, b2))
    ref2 = reference_forward(x2, w1, b1, w2, b2)
    assert out2.shape == (B2, 10)
    assert jnp.allclose(out2, ref2, atol=1e-4, rtol=1e-4), "mismatch vs reference (B=4100)"

    print("KERNEL_OK")
</pallas_src>

<mosaic_0001>
module attributes {stable_mosaic.version = 11 : i64} {
  func.func @mlp_kernel(%arg0: i32, %arg1: memref<2x128xf32, #tpu.memory_space<vmem>>, %arg2: memref<50x2xf32, #tpu.memory_space<vmem>>, %arg3: memref<50x1xf32, #tpu.memory_space<vmem>>, %arg4: memref<10x50xf32, #tpu.memory_space<vmem>>, %arg5: memref<10x1xf32, #tpu.memory_space<vmem>>, %arg6: memref<10x128xf32, #tpu.memory_space<vmem>>) attributes {dimension_semantics = [#tpu.dimension_semantics<parallel>], iteration_bounds = array<i64: 1>, scalar_prefetch = 0 : i64, scratch_operands = 0 : i64, tpu.core_type = #tpu.core_type<tc>, window_params = [{transform_indices = @transform_0, window_bounds = array<i64: 2, 128>}, {pipeline_mode = #tpu.pipeline_mode<synchronous>, transform_indices = @transform_1, window_bounds = array<i64: 50, 2>}, {pipeline_mode = #tpu.pipeline_mode<synchronous>, transform_indices = @transform_2, window_bounds = array<i64: 50, 1>}, {pipeline_mode = #tpu.pipeline_mode<synchronous>, transform_indices = @transform_3, window_bounds = array<i64: 10, 50>}, {pipeline_mode = #tpu.pipeline_mode<synchronous>, transform_indices = @transform_4, window_bounds = array<i64: 10, 1>}, {transform_indices = @transform_5, window_bounds = array<i64: 10, 128>}]} {
    %c0 = arith.constant 0 : index
    %c0_0 = arith.constant 0 : index
    %0 = vector.load %arg1[%c0, %c0_0] : memref<2x128xf32, #tpu.memory_space<vmem>>, vector<2x128xf32>
    %c0_1 = arith.constant 0 : index
    %c0_2 = arith.constant 0 : index
    %1 = vector.load %arg2[%c0_1, %c0_2] : memref<50x2xf32, #tpu.memory_space<vmem>>, vector<50x2xf32>
    %2 = vector.extract_strided_slice %1 {offsets = [0, 0], sizes = [50, 1], strides = [1, 1]} : vector<50x2xf32> to vector<50x1xf32>
    %3 = vector.extract_strided_slice %0 {offsets = [0, 0], sizes = [1, 128], strides = [1, 1]} : vector<2x128xf32> to vector<1x128xf32>
    %4 = vector.broadcast %2 : vector<50x1xf32> to vector<50x128xf32>
    %5 = vector.broadcast %3 : vector<1x128xf32> to vector<50x128xf32>
    %6 = arith.mulf %4, %5 : vector<50x128xf32>
    %7 = vector.extract_strided_slice %1 {offsets = [0, 1], sizes = [50, 1], strides = [1, 1]} : vector<50x2xf32> to vector<50x1xf32>
    %8 = vector.extract_strided_slice %0 {offsets = [1, 0], sizes = [1, 128], strides = [1, 1]} : vector<2x128xf32> to vector<1x128xf32>
    %9 = vector.broadcast %7 : vector<50x1xf32> to vector<50x128xf32>
    %10 = vector.broadcast %8 : vector<1x128xf32> to vector<50x128xf32>
    %11 = arith.mulf %9, %10 : vector<50x128xf32>
    %12 = arith.addf %6, %11 : vector<50x128xf32>
    %c0_3 = arith.constant 0 : index
    %c0_4 = arith.constant 0 : index
    %13 = vector.load %arg3[%c0_3, %c0_4] : memref<50x1xf32, #tpu.memory_space<vmem>>, vector<50x1xf32>
    %14 = vector.broadcast %13 : vector<50x1xf32> to vector<50x128xf32>
    %15 = arith.addf %12, %14 : vector<50x128xf32>
    %cst = arith.constant 0.000000e+00 : f32
    %16 = vector.broadcast %cst : f32 to vector<50x128xf32>
    %17 = arith.maximumf %15, %16 : vector<50x128xf32>
    %c0_5 = arith.constant 0 : index
    %c0_6 = arith.constant 0 : index
    %18 = vector.load %arg4[%c0_5, %c0_6] : memref<10x50xf32, #tpu.memory_space<vmem>>, vector<10x50xf32>
    %cst_7 = arith.constant dense<0.000000e+00> : vector<10x128xf32>
    %19 = tpu.matmul %18, %17, %cst_7 {dimension_numbers = #tpu.dot_dimension_numbers<[1], [0], [0], [1], [0, 0, 1, 1], [], []>, precision = #tpu.contract_precision<fp32>} : vector<10x50xf32>, vector<50x128xf32>, vector<10x128xf32> -> vector<10x128xf32>
    %c0_8 = arith.constant 0 : index
    %c0_9 = arith.constant 0 : index
    %20 = vector.load %arg5[%c0_8, %c0_9] : memref<10x1xf32, #tpu.memory_space<vmem>>, vector<10x1xf32>
    %21 = vector.broadcast %20 : vector<10x1xf32> to vector<10x128xf32>
    %22 = arith.addf %19, %21 : vector<10x128xf32>
    %c0_10 = arith.constant 0 : index
    %c0_11 = arith.constant 0 : index
    %23 = vector.load %arg6[%c0_10, %c0_11] : memref<10x128xf32, #tpu.memory_space<vmem>>, vector<10x128xf32>
    tpu.vector_store %arg6[%c0_10, %c0_11], %22 {strides = array<i32>} : memref<10x128xf32, #tpu.memory_space<vmem>>, vector<10x128xf32>,
    return
  }
  func.func @transform_0(%arg0: i32) -> (i32, i32) {
    %c0_i32 = arith.constant 0 : i32
    %c0_i32_0 = arith.constant 0 : i32
    return %c0_i32, %arg0 : i32, i32
  }
  func.func @transform_1(%arg0: i32) -> (i32, i32) {
    %c0_i32 = arith.constant 0 : i32
    %c0_i32_0 = arith.constant 0 : i32
    %c0_i32_1 = arith.constant 0 : i32
    return %c0_i32, %c0_i32_0 : i32, i32
  }
  func.func @transform_2(%arg0: i32) -> (i32, i32) {
    %c0_i32 = arith.constant 0 : i32
    %c0_i32_0 = arith.constant 0 : i32
    %c0_i32_1 = arith.constant 0 : i32
    return %c0_i32, %c0_i32_0 : i32, i32
  }
  func.func @transform_3(%arg0: i32) -> (i32, i32) {
    %c0_i32 = arith.constant 0 : i32
    %c0_i32_0 = arith.constant 0 : i32
    %c0_i32_1 = arith.constant 0 : i32
    return %c0_i32, %c0_i32_0 : i32, i32
  }
  func.func @transform_4(%arg0: i32) -> (i32, i32) {
    %c0_i32 = arith.constant 0 : i32
    %c0_i32_0 = arith.constant 0 : i32
    %c0_i32_1 = arith.constant 0 : i32
    return %c0_i32, %c0_i32_0 : i32, i32
  }
  func.func @transform_5(%arg0: i32) -> (i32, i32) {
    %c0_i32 = arith.constant 0 : i32
    %c0_i32_0 = arith.constant 0 : i32
    return %c0_i32, %arg0 : i32, i32
  }
}

</mosaic_0001>

<llo_original>
// kernel: pool_encoder_forward.1
$region0: #{pool_encoder_forward.1}
  #allocation0 [shape = 'u32[]', space=smem, size = 0x4, offset = 0x4, fixed_abs, tag = 'smem constant byte address 0x4 - core index']
  #allocation1 [shape = 'u32[72,128]{1,0:T(1,128)}', space=vmem, size = 0x9000, scoped, tag = 'internal scratch']
  %s0 = inlined_call_operand.vmem [shape: f32[2,128], index: 0, kind: input, shape index: {}]
  %s1 = inlined_call_operand.vmem [shape: f32[50,2], index: 1, kind: input, shape index: {}]
  %s2 = inlined_call_operand.vmem [shape: f32[50,1], index: 2, kind: input, shape index: {}]
  %s3 = inlined_call_operand.vmem [shape: f32[10,50], index: 3, kind: input, shape index: {}]
  %s4 = inlined_call_operand.vmem [shape: f32[10,1], index: 4, kind: input, shape index: {}]
  %s5 = inlined_call_operand.vmem [shape: f32[10,128], index: 5, kind: output, shape index: {}]
  %s6 = sld [smem:[#allocation0]]
  $region30: #{pool_encoder_forward.1} parent=0
    _
  %s8 = ssub.s32 1, %s6
  %s9 = scalar_select 0, %s8, %s6
  // Predicated region
  $region2: #{pool_encoder_forward.1} parent=0 // pred_check
    _
  $region3: #{pool_encoder_forward.1} parent=0 // pred_check_branch
    %11 = sbr.rel (0) target = $region5
  $region4: #{pool_encoder_forward.1} parent=0 // pred_region
    _
  $region5: #{pool_encoder_forward.1} parent=0 // pred_fallthru
    _
  // Predicated region
  $region6: #{pool_encoder_forward.1} parent=0 // pred_check
    _
  $region7: #{pool_encoder_forward.1} parent=0 // pred_check_branch
    %13 = sbr.rel (0) target = $region9
  $region8: #{pool_encoder_forward.1} parent=0 // pred_region
    _
  $region9: #{pool_encoder_forward.1} parent=0 // pred_fallthru
    _
  // Predicated region
  $region10: #{pool_encoder_forward.1} parent=0 // pred_check
    _
  $region11: #{pool_encoder_forward.1} parent=0 // pred_check_branch
    %15 = sbr.rel (0) target = $region13
  $region12: #{pool_encoder_forward.1} parent=0 // pred_region
    _
  $region13: #{pool_encoder_forward.1} parent=0 // pred_fallthru
    _
  // Predicated region
  $region14: #{pool_encoder_forward.1} parent=0 // pred_check
    _
  $region15: #{pool_encoder_forward.1} parent=0 // pred_check_branch
    %17 = sbr.rel (0) target = $region17
  $region16: #{pool_encoder_forward.1} parent=0 // pred_region
    _
  $region17: #{pool_encoder_forward.1} parent=0 // pred_fallthru
    _
  // Predicated region
  $region18: #{pool_encoder_forward.1} parent=0 // pred_check
    _
  $region19: #{pool_encoder_forward.1} parent=0 // pred_check_branch
    %19 = sbr.rel (0) target = $region21
  $region20: #{pool_encoder_forward.1} parent=0 // pred_region
    _
  $region21: #{pool_encoder_forward.1} parent=0 // pred_fallthru
    _
  %v20 = vld [vmem:[%s0] sm:$0x3]
  %v21 = vld [vmem:[%s1] sm:$0xff]
  %v22 = vld [vmem:[%s1 + $0x8] sm:$0xff]
  %v23 = vld [vmem:[%s1 + $0x10] sm:$0xff]
  %v24 = vld [vmem:[%s1 + $0x18] sm:$0xff]
  %v25 = vld [vmem:[%s1 + $0x20] sm:$0xff]
  %v26 = vld [vmem:[%s1 + $0x28] sm:$0xff]
  %v27 = vld [vmem:[%s1 + $0x30] sm:$0x3]
  %29 = vset.pattern.permute.xlu0 0
  %30 = vperm.xlu0 %29, %v21
  %v31 = vpop.permute.xlu0 %30
  %34 = vset.pattern.permute.xlu0 0
  %35 = vperm.xlu0 %34, %v22
  %v36 = vpop.permute.xlu0 %35
  %39 = vset.pattern.permute.xlu0 0
  %40 = vperm.xlu0 %39, %v23
  %v41 = vpop.permute.xlu0 %40
  %44 = vset.pattern.permute.xlu0 0
  %45 = vperm.xlu0 %44, %v24
  %v46 = vpop.permute.xlu0 %45
  %49 = vset.pattern.permute.xlu0 0
  %50 = vperm.xlu0 %49, %v25
  %v51 = vpop.permute.xlu0 %50
  %54 = vset.pattern.permute.xlu0 0
  %55 = vperm.xlu0 %54, %v26
  %v56 = vpop.permute.xlu0 %55
  %59 = vset.pattern.permute.xlu0 0
  %60 = vperm.xlu0 %59, %v27
  %v61 = vpop.permute.xlu0 %60
  %v63 = vperm.slane %v20, 0
  %v64 = vmul.f32 %v31, %v63
  %v65 = vmul.f32 %v36, %v63
  %v66 = vmul.f32 %v41, %v63
  %v67 = vmul.f32 %v46, %v63
  %v68 = vmul.f32 %v51, %v63
  %v69 = vmul.f32 %v56, %v63
  %v70 = vmul.f32 %v61, %v63
  %71 = vset.pattern.permute.xlu0 1
  %72 = vperm.xlu0 %71, %v21
  %v73 = vpop.permute.xlu0 %72
  %75 = vset.pattern.permute.xlu0 1
  %76 = vperm.xlu0 %75, %v22
  %v77 = vpop.permute.xlu0 %76
  %79 = vset.pattern.permute.xlu0 1
  %80 = vperm.xlu0 %79, %v23
  %v81 = vpop.permute.xlu0 %80
  %83 = vset.pattern.permute.xlu0 1
  %84 = vperm.xlu0 %83, %v24
  %v85 = vpop.permute.xlu0 %84
  %87 = vset.pattern.permute.xlu0 1
  %88 = vperm.xlu0 %87, %v25
  %v89 = vpop.permute.xlu0 %88
  %91 = vset.pattern.permute.xlu0 1
  %92 = vperm.xlu0 %91, %v26
  %v93 = vpop.permute.xlu0 %92
  %95 = vset.pattern.permute.xlu0 1
  %96 = vperm.xlu0 %95, %v27
  %v97 = vpop.permute.xlu0 %96
  %v99 = vperm.slane %v20, 1
  %v100 = vmul.f32 %v73, %v99
  %v101 = vmul.f32 %v77, %v99
  %v102 = vmul.f32 %v81, %v99
  %v103 = vmul.f32 %v85, %v99
  %v104 = vmul.f32 %v89, %v99
  %v105 = vmul.f32 %v93, %v99
  %v106 = vmul.f32 %v97, %v99
  %v107 = vadd.f32 %v64, %v100
  %v108 = vadd.f32 %v65, %v101
  %v109 = vadd.f32 %v66, %v102
  %v110 = vadd.f32 %v67, %v103
  %v111 = vadd.f32 %v68, %v104
  %v112 = vadd.f32 %v69, %v105
  %v113 = vadd.f32 %v70, %v106
  %v114 = vld [vmem:[%s2] sm:$0xff]
  %v115 = vld [vmem:[%s2 + $0x8] sm:$0xff]
  %v116 = vld [vmem:[%s2 + $0x10] sm:$0xff]
  %v117 = vld [vmem:[%s2 + $0x18] sm:$0xff]
  %v118 = vld [vmem:[%s2 + $0x20] sm:$0xff]
  %v119 = vld [vmem:[%s2 + $0x28] sm:$0xff]
  %v120 = vld [vmem:[%s2 + $0x30] sm:$0x3]
  %122 = vset.pattern.permute.xlu0 0
  %123 = vperm.xlu0 %122, %v114
  %v124 = vpop.permute.xlu0 %123
  %127 = vset.pattern.permute.xlu0 0
  %128 = vperm.xlu0 %127, %v115
  %v129 = vpop.permute.xlu0 %128
  %132 = vset.pattern.permute.xlu0 0
  %133 = vperm.xlu0 %132, %v116
  %v134 = vpop.permute.xlu0 %133
  %137 = vset.pattern.permute.xlu0 0
  %138 = vperm.xlu0 %137, %v117
  %v139 = vpop.permute.xlu0 %138
  %142 = vset.pattern.permute.xlu0 0
  %143 = vperm.xlu0 %142, %v118
  %v144 = vpop.permute.xlu0 %143
  %147 = vset.pattern.permute.xlu0 0
  %148 = vperm.xlu0 %147, %v119
  %v149 = vpop.permute.xlu0 %148
  %152 = vset.pattern.permute.xlu0 0
  %153 = vperm.xlu0 %152, %v120
  %v154 = vpop.permute.xlu0 %153
  %v156 = vadd.f32 %v107, %v124
  %v157 = vadd.f32 %v108, %v129
  %v158 = vadd.f32 %v109, %v134
  %v159 = vadd.f32 %v110, %v139
  %v160 = vadd.f32 %v111, %v144
  %v161 = vadd.f32 %v112, %v149
  %v162 = vadd.f32 %v113, %v154
  %v163 = vmax.f32 %v156, 0.0
  %v164 = vmax.f32 %v157, 0.0
  %v165 = vmax.f32 %v158, 0.0
  %v166 = vmax.f32 %v159, 0.0
  %v167 = vmax.f32 %v160, 0.0
  %v168 = vmax.f32 %v161, 0.0
  %v169 = vmax.f32 %v162, 0.0
  %v170 = vld [vmem:[%s3] sm:$0xff]
  %v171 = vld [vmem:[%s3 + $0x8] sm:$0x3]
  %v172 = vld [vmem:[%s4] sm:$0xff]
  %v173 = vld [vmem:[%s4 + $0x8] sm:$0x3]
  %175 = vset.pattern.permute.xlu0 0
  %176 = vperm.xlu0 %175, %v172
  %v177 = vpop.permute.xlu0 %176
  %180 = vset.pattern.permute.xlu0 0
  %181 = vperm.xlu0 %180, %v173
  %v182 = vpop.permute.xlu0 %181
  %vm184 = vcmask 408576
  %v186 = vsel %vm184, %v170, 0
  %v189 = vsel %vm184, %v171, 0
  %vm191 = vcmask 1041408
  %v193 = vsel %vm191, %v169, 0
  %195 = vmatpush.msra.mxu0 0.0
  %196 = vmatpush.msra.mxu0 0.0
  %197 = vmatpush.msra.mxu0 0.0
  %198 = vmatpush.msra.mxu0 0.0
  %199 = vmatpush.msra.mxu0 0.0
  %200 = vmatpush.msra.mxu0 0.0
  %201 = vmatpush.msra.mxu0 0.0
  %202 = vmatpush.msra.mxu0 0.0
  %203 = vmatpush.msra.mxu0 0.0
  %v204 = vand.u32 %v193, 4294901760
  %205 = vmatpush.msra.mxu0 %v204
  %v206 = vand.u32 %v168, 4294901760
  %207 = vmatpush.msra.mxu0 %v206
  %v208 = vand.u32 %v167, 4294901760
  %209 = vmatpush.msra.mxu0 %v208
  %v210 = vand.u32 %v166, 4294901760
  %211 = vmatpush.msra.mxu0 %v210
  %v212 = vand.u32 %v165, 4294901760
  %213 = vmatpush.msra.mxu0 %v212
  %v214 = vand.u32 %v164, 4294901760
  %215 = vmatpush.msra.mxu0 %v214
  %v216 = vand.u32 %v163, 4294901760
  %217 = vmatpush.msra.mxu0 %v216
  %v218 = vand.u32 %v186, 4294901760
  %v219 = vsub.f32 %v186, %v218
  %v220 = vand.u32 %v219, 4294901760
  %v221 = vsub.f32 %v219, %v220
  %v222 = vand.u32 %v221, 4294901760
  %223 = vmatmul.f32.gmra.mxu0 %v222
  %v224 = vpop.f32.mrf.mxu0
  %v225 = vadd.f32 %v177, %v224
  %v226 = vand.u32 %v189, 4294901760
  %v227 = vsub.f32 %v189, %v226
  %v228 = vand.u32 %v227, 4294901760
  %v229 = vsub.f32 %v227, %v228
  %v230 = vand.u32 %v229, 4294901760
  %231 = vmatmul.f32.gmra.mxu0 %v230
  %v232 = vpop.f32.mrf.mxu0
  %v233 = vadd.f32 %v182, %v232
  %234 = vdwg.mxu0
  %235 = vmatpush.msra.mxu0 0.0
  %236 = vmatpush.msra.mxu0 0.0
  %237 = vmatpush.msra.mxu0 0.0
  %238 = vmatpush.msra.mxu0 0.0
  %239 = vmatpush.msra.mxu0 0.0
  %240 = vmatpush.msra.mxu0 0.0
  %241 = vmatpush.msra.mxu0 0.0
  %242 = vmatpush.msra.mxu0 0.0
  %243 = vmatpush.msra.mxu0 0.0
  %v244 = vand.u32 %v193, 4294901760
  %v245 = vsub.f32 %v193, %v244
  %v246 = vand.u32 %v245, 4294901760
  %v247 = vsub.f32 %v245, %v246
  %v248 = vand.u32 %v247, 4294901760
  %249 = vmatpush.msra.mxu0 %v248
  %v250 = vand.u32 %v168, 4294901760
  %v251 = vsub.f32 %v168, %v250
  %v252 = vand.u32 %v251, 4294901760
  %v253 = vsub.f32 %v251, %v252
  %v254 = vand.u32 %v253, 4294901760
  %255 = vmatpush.msra.mxu0 %v254
  %v256 = vand.u32 %v167, 4294901760
  %v257 = vsub.f32 %v167, %v256
  %v258 = vand.u32 %v257, 4294901760
  %v259 = vsub.f32 %v257, %v258
  %v260 = vand.u32 %v259, 4294901760
  %261 = vmatpush.msra.mxu0 %v260
  %v262 = vand.u32 %v166, 4294901760
  %v263 = vsub.f32 %v166, %v262
  %v264 = vand.u32 %v263, 4294901760
  %v265 = vsub.f32 %v263, %v264
  %v266 = vand.u32 %v265, 4294901760
  %267 = vmatpush.msra.mxu0 %v266
  %v268 = vand.u32 %v165, 4294901760
  %v269 = vsub.f32 %v165, %v268
  %v270 = vand.u32 %v269, 4294901760
  %v271 = vsub.f32 %v269, %v270
  %v272 = vand.u32 %v271, 4294901760
  %273 = vmatpush.msra.mxu0 %v272
  %v274 = vand.u32 %v164, 4294901760
  %v275 = vsub.f32 %v164, %v274
  %v276 = vand.u32 %v275, 4294901760
  %v277 = vsub.f32 %v275, %v276
  %v278 = vand.u32 %v277, 4294901760
  %279 = vmatpush.msra.mxu0 %v278
  %v280 = vand.u32 %v163, 4294901760
  %v281 = vsub.f32 %v163, %v280
  %v282 = vand.u32 %v281, 4294901760
  %v283 = vsub.f32 %v281, %v282
  %v284 = vand.u32 %v283, 4294901760
  %285 = vmatpush.msra.mxu0 %v284
  %v286 = vand.u32 %v186, 4294901760
  %287 = vmatmul.f32.gmra.mxu0 %v286
  %v288 = vpop.f32.mrf.mxu0
  %v289 = vadd.f32 %v225, %v288
  %v290 = vand.u32 %v189, 4294901760
  %291 = vmatmul.f32.gmra.mxu0 %v290
  %v292 = vpop.f32.mrf.mxu0
  %v293 = vadd.f32 %v233, %v292
  %294 = vdwg.mxu0
  %295 = vmatpush.msra.mxu0 0.0
  %296 = vmatpush.msra.mxu0 0.0
  %297 = vmatpush.msra.mxu0 0.0
  %298 = vmatpush.msra.mxu0 0.0
  %299 = vmatpush.msra.mxu0 0.0
  %300 = vmatpush.msra.mxu0 0.0
  %301 = vmatpush.msra.mxu0 0.0
  %302 = vmatpush.msra.mxu0 0.0
  %303 = vmatpush.msra.mxu0 0.0
  %v304 = vand.u32 %v193, 4294901760
  %v305 = vsub.f32 %v193, %v304
  %306 = vmatpush.msra.mxu0 %v305
  %v307 = vand.u32 %v168, 4294901760
  %v308 = vsub.f32 %v168, %v307
  %309 = vmatpush.msra.mxu0 %v308
  %v310 = vand.u32 %v167, 4294901760
  %v311 = vsub.f32 %v167, %v310
  %312 = vmatpush.msra.mxu0 %v311
  %v313 = vand.u32 %v166, 4294901760
  %v314 = vsub.f32 %v166, %v313
  %315 = vmatpush.msra.mxu0 %v314
  %v316 = vand.u32 %v165, 4294901760
  %v317 = vsub.f32 %v165, %v316
  %318 = vmatpush.msra.mxu0 %v317
  %v319 = vand.u32 %v164, 4294901760
  %v320 = vsub.f32 %v164, %v319
  %321 = vmatpush.msra.mxu0 %v320
  %v322 = vand.u32 %v163, 4294901760
  %v323 = vsub.f32 %v163, %v322
  %324 = vmatpush.msra.mxu0 %v323
  %v325 = vand.u32 %v186, 4294901760
  %v326 = vsub.f32 %v186, %v325
  %327 = vmatmul.f32.gmra.mxu0 %v326
  %v328 = vpop.f32.mrf.mxu0
  %v329 = vadd.f32 %v289, %v328
  %v330 = vand.u32 %v189, 4294901760
  %v331 = vsub.f32 %v189, %v330
  %332 = vmatmul.f32.gmra.mxu0 %v331
  %v333 = vpop.f32.mrf.mxu0
  %v334 = vadd.f32 %v293, %v333
  %335 = vdwg.mxu0
  %336 = vmatpush.msra.mxu0 0.0
  %337 = vmatpush.msra.mxu0 0.0
  %338 = vmatpush.msra.mxu0 0.0
  %339 = vmatpush.msra.mxu0 0.0
  %340 = vmatpush.msra.mxu0 0.0
  %341 = vmatpush.msra.mxu0 0.0
  %342 = vmatpush.msra.mxu0 0.0
  %343 = vmatpush.msra.mxu0 0.0
  %344 = vmatpush.msra.mxu0 0.0
  %v345 = vand.u32 %v193, 4294901760
  %346 = vmatpush.msra.mxu0 %v345
  %v347 = vand.u32 %v168, 4294901760
  %348 = vmatpush.msra.mxu0 %v347
  %v349 = vand.u32 %v167, 4294901760
  %350 = vmatpush.msra.mxu0 %v349
  %v351 = vand.u32 %v166, 4294901760
  %352 = vmatpush.msra.mxu0 %v351
  %v353 = vand.u32 %v165, 4294901760
  %354 = vmatpush.msra.mxu0 %v353
  %v355 = vand.u32 %v164, 4294901760
  %356 = vmatpush.msra.mxu0 %v355
  %v357 = vand.u32 %v163, 4294901760
  %358 = vmatpush.msra.mxu0 %v357
  %v359 = vand.u32 %v186, 4294901760
  %v360 = vsub.f32 %v186, %v359
  %v361 = vand.u32 %v360, 4294901760
  %362 = vmatmul.f32.gmra.mxu0 %v361
  %v363 = vpop.f32.mrf.mxu0
  %v364 = vadd.f32 %v329, %v363
  %v365 = vand.u32 %v189, 4294901760
  %v366 = vsub.f32 %v189, %v365
  %v367 = vand.u32 %v366, 4294901760
  %368 = vmatmul.f32.gmra.mxu0 %v367
  %v369 = vpop.f32.mrf.mxu0
  %v370 = vadd.f32 %v334, %v369
  %371 = vdwg.mxu0
  %372 = vmatpush.msra.mxu0 0.0
  %373 = vmatpush.msra.mxu0 0.0
  %374 = vmatpush.msra.mxu0 0.0
  %375 = vmatpush.msra.mxu0 0.0
  %376 = vmatpush.msra.mxu0 0.0
  %377 = vmatpush.msra.mxu0 0.0
  %378 = vmatpush.msra.mxu0 0.0
  %379 = vmatpush.msra.mxu0 0.0
  %380 = vmatpush.msra.mxu0 0.0
  %v381 = vand.u32 %v193, 4294901760
  %v382 = vsub.f32 %v193, %v381
  %v383 = vand.u32 %v382, 4294901760
  %384 = vmatpush.msra.mxu0 %v383
  %v385 = vand.u32 %v168, 4294901760
  %v386 = vsub.f32 %v168, %v385
  %v387 = vand.u32 %v386, 4294901760
  %388 = vmatpush.msra.mxu0 %v387
  %v389 = vand.u32 %v167, 4294901760
  %v390 = vsub.f32 %v167, %v389
  %v391 = vand.u32 %v390, 4294901760
  %392 = vmatpush.msra.mxu0 %v391
  %v393 = vand.u32 %v166, 4294901760
  %v394 = vsub.f32 %v166, %v393
  %v395 = vand.u32 %v394, 4294901760
  %396 = vmatpush.msra.mxu0 %v395
  %v397 = vand.u32 %v165, 4294901760
  %v398 = vsub.f32 %v165, %v397
  %v399 = vand.u32 %v398, 4294901760
  %400 = vmatpush.msra.mxu0 %v399
  %v401 = vand.u32 %v164, 4294901760
  %v402 = vsub.f32 %v164, %v401
  %v403 = vand.u32 %v402, 4294901760
  %404 = vmatpush.msra.mxu0 %v403
  %v405 = vand.u32 %v163, 4294901760
  %v406 = vsub.f32 %v163, %v405
  %v407 = vand.u32 %v406, 4294901760
  %408 = vmatpush.msra.mxu0 %v407
  %v409 = vand.u32 %v186, 4294901760
  %410 = vmatmul.f32.gmra.mxu0 %v409
  %v411 = vpop.f32.mrf.mxu0
  %v412 = vadd.f32 %v364, %v411
  %v413 = vand.u32 %v189, 4294901760
  %414 = vmatmul.f32.gmra.mxu0 %v413
  %v415 = vpop.f32.mrf.mxu0
  %v416 = vadd.f32 %v370, %v415
  %417 = vdwg.mxu0
  %418 = vmatpush.msra.mxu0 0.0
  %419 = vmatpush.msra.mxu0 0.0
  %420 = vmatpush.msra.mxu0 0.0
  %421 = vmatpush.msra.mxu0 0.0
  %422 = vmatpush.msra.mxu0 0.0
  %423 = vmatpush.msra.mxu0 0.0
  %424 = vmatpush.msra.mxu0 0.0
  %425 = vmatpush.msra.mxu0 0.0
  %426 = vmatpush.msra.mxu0 0.0
  %v427 = vand.u32 %v193, 4294901760
  %428 = vmatpush.msra.mxu0 %v427
  %v429 = vand.u32 %v168, 4294901760
  %430 = vmatpush.msra.mxu0 %v429
  %v431 = vand.u32 %v167, 4294901760
  %432 = vmatpush.msra.mxu0 %v431
  %v433 = vand.u32 %v166, 4294901760
  %434 = vmatpush.msra.mxu0 %v433
  %v435 = vand.u32 %v165, 4294901760
  %436 = vmatpush.msra.mxu0 %v435
  %v437 = vand.u32 %v164, 4294901760
  %438 = vmatpush.msra.mxu0 %v437
  %v439 = vand.u32 %v163, 4294901760
  %440 = vmatpush.msra.mxu0 %v439
  %v441 = vand.u32 %v186, 4294901760
  %442 = vmatmul.f32.gmra.mxu0 %v441
  %v443 = vpop.f32.mrf.mxu0
  %v444 = vadd.f32 %v412, %v443
  %v445 = vand.u32 %v189, 4294901760
  %446 = vmatmul.f32.gmra.mxu0 %v445
  %v447 = vpop.f32.mrf.mxu0
  %v448 = vadd.f32 %v416, %v447
  %449 = vdwg.mxu0
  %450 = vst [vmem:[%s5] sm:$0xff] %v444
  %451 = vst [vmem:[%s5 + $0x8] sm:$0x3] %v448
  // Predicated region
  $region22: #{pool_encoder_forward.1} parent=0 // pred_check
    _
  $region23: #{pool_encoder_forward.1} parent=0 // pred_check_branch
    %453 = sbr.rel (0) target = $region25
  $region24: #{pool_encoder_forward.1} parent=0 // pred_region
    _
  $region25: #{pool_encoder_forward.1} parent=0 // pred_fallthru
    _
  // Predicated region
  $region26: #{pool_encoder_forward.1} parent=0 // pred_check
    _
  $region27: #{pool_encoder_forward.1} parent=0 // pred_check_branch
    %455 = sbr.rel (0) target = $region29
  $region28: #{pool_encoder_forward.1} parent=0 // pred_region
    _
  $region29: #{pool_encoder_forward.1} parent=0 // pred_fallthru
    _

</llo_original>
